<compile_context>
chip_gen: v7x
topology: tpu7x:2x2x1
jax: 0.10.0
libtpu: 0.0.40
codegen_flags: <defaults>
</compile_context>

<pallas_src>
import jax
import jax.numpy as jnp
from jax.experimental import pallas as pl
from jax.experimental.pallas import tpu as pltpu

BN_EPS = 1e-5


def _bike_volume_kernel(x_ref, w1_ref, b1_ref, w2_ref, b2_ref, w3t_ref, b3_ref, out_ref):
    x = x_ref[...]  # (TILE_N, D) f32

    # Layer 1: Linear (BN already folded into w1/b1) + ReLU
    h1 = jnp.maximum(
        jnp.dot(x, w1_ref[...], preferred_element_type=jnp.float32) + b1_ref[...], 0.0
    )
    # TODO(synk): nn.Dropout(0.3) is identity at inference; training-mode RNG mask not implemented.

    # Layer 2: Linear (BN folded) + ReLU
    h2 = jnp.maximum(
        jnp.dot(h1, w2_ref[...], preferred_element_type=jnp.float32) + b2_ref[...], 0.0
    )

    # Output head, lane-dense: (1,16) contracted with (TILE_N,16) over the feature
    # dim -> (1, TILE_N), so the store is an unmasked full-lane vst.
    out = jax.lax.dot_general(
        w3t_ref[...], h2,
        dimension_numbers=(((1,), (1,)), ((), ())),
        preferred_element_type=jnp.float32,
    )
    out_ref[...] = out + b3_ref[...]


def bike_volume_nn(x, params, *, tile_n=1024):
    """x: (N, D) float32. params: dict of weights (see init_params). Returns (N, 1)."""
    n, d = x.shape

    # ---- Fold inference-mode BatchNorm1d into the preceding Linear layers ----
    s1 = params["g1"] * jax.lax.rsqrt(params["v1"] + BN_EPS)          # (1, 32)
    w1 = params["w1"] * s1                                            # (D, 32)
    b1 = (params["b1"] - params["m1"]) * s1 + params["be1"]           # (1, 32)
    s2 = params["g2"] * jax.lax.rsqrt(params["v2"] + BN_EPS)          # (1, 16)
    w2 = params["w2"] * s2                                            # (32, 16)
    b2 = (params["b2"] - params["m2"]) * s2 + params["be2"]           # (1, 16)
    w3t = params["w3"].T                                              # (1, 16)
    b3 = params["b3"]                                                 # (1, 1)

    # ---- Row tiling over the batch axis ----
    assert tile_n % 128 == 0, "tile_n must be a multiple of 128 (lane-dense output tiles)"
    if n <= tile_n:
        tile = max(8, ((n + 7) // 8) * 8)       # single sublane-aligned full tile
    else:
        tile = tile_n
    n_pad = ((n + tile - 1) // tile) * tile
    if n_pad != n:
        x = jnp.pad(x, ((0, n_pad - n), (0, 0)))
    grid = (n_pad // tile,)

    const = lambda i: (0, 0)                    # weights stay VMEM-resident across tiles
    out = pl.pallas_call(
        _bike_volume_kernel,
        out_shape=jax.ShapeDtypeStruct((1, n_pad), jnp.float32),
        grid=grid,
        in_specs=[
            pl.BlockSpec((tile, d), lambda i: (i, 0)),   # streamed x tiles
            pl.BlockSpec(w1.shape, const),
            pl.BlockSpec(b1.shape, const),
            pl.BlockSpec(w2.shape, const),
            pl.BlockSpec(b2.shape, const),
            pl.BlockSpec(w3t.shape, const),
            pl.BlockSpec(b3.shape, const),
        ],
        out_specs=pl.BlockSpec((1, tile), lambda i: (0, i)),
        compiler_params=pltpu.CompilerParams(dimension_semantics=("parallel",)),
    )(x, w1, b1, w2, b2, w3t, b3)

    return out[0, :n][:, None]                  # back to (N, 1)


def init_params(key, input_dim):
    """Deterministic synthetic parameters matching BikeVolumeNN(input_dim, num_layers=2)."""
    ks = jax.random.split(key, 6)
    f32 = jnp.float32

    def lin(k, fan_in, fan_out):
        kw, kb = jax.random.split(k)
        bound = 1.0 / jnp.sqrt(fan_in)
        w = jax.random.uniform(kw, (fan_in, fan_out), f32, -bound, bound)
        b = jax.random.uniform(kb, (1, fan_out), f32, -bound, bound)
        return w, b

    w1, b1 = lin(ks[0], input_dim, 32)
    w2, b2 = lin(ks[1], 32, 16)
    w3, b3 = lin(ks[2], 16, 1)

    # BatchNorm1d params: gamma=1, beta=0; running stats deterministic but non-trivial.
    m1 = 0.05 * jax.random.normal(ks[3], (1, 32), f32)
    v1 = 1.0 + 0.1 * jax.random.uniform(ks[4], (1, 32), f32)
    m2 = 0.05 * jax.random.normal(ks[5], (1, 16), f32)
    v2 = 1.0 + 0.1 * jax.random.uniform(ks[5], (1, 16), f32)

    return dict(
        w1=w1, b1=b1, g1=jnp.ones((1, 32), f32), be1=jnp.zeros((1, 32), f32), m1=m1, v1=v1,
        w2=w2, b2=b2, g2=jnp.ones((1, 16), f32), be2=jnp.zeros((1, 16), f32), m2=m2, v2=v2,
        w3=w3, b3=b3,
    )


def _reference(x, p):
    """Plain-JAX reference of the same forward pass (inference mode, unfolded BN)."""
    z1 = x @ p["w1"] + p["b1"]
    z1 = (z1 - p["m1"]) / jnp.sqrt(p["v1"] + BN_EPS) * p["g1"] + p["be1"]
    h1 = jnp.maximum(z1, 0.0)
    z2 = h1 @ p["w2"] + p["b2"]
    z2 = (z2 - p["m2"]) / jnp.sqrt(p["v2"] + BN_EPS) * p["g2"] + p["be2"]
    h2 = jnp.maximum(z2, 0.0)
    return h2 @ p["w3"] + p["b3"]


if __name__ == "__main__":
    key = jax.random.PRNGKey(0)
    k_x, k_p = jax.random.split(key)

    batch, input_dim = 200, 16          # small shapes; 200 exercises padding + 2 grid tiles
    x = jax.random.normal(k_x, (batch, input_dim), jnp.float32)
    params = init_params(k_p, input_dim)

    out = bike_volume_nn(x, params, tile_n=128)   # small tile just to exercise the row grid
    out = jax.block_until_ready(out)

    ref = _reference(x, params)
    assert out.shape == (batch, 1)
    assert jnp.allclose(out, ref, atol=1e-4, rtol=1e-4), (out, ref)

    print("KERNEL_OK")
</pallas_src>

<mosaic_0001>
module attributes {stable_mosaic.version = 11 : i64} {
  func.func @_bike_volume_kernel(%arg0: i32, %arg1: memref<128x16xf32, #tpu.memory_space<vmem>>, %arg2: memref<16x32xf32, #tpu.memory_space<vmem>>, %arg3: memref<1x32xf32, #tpu.memory_space<vmem>>, %arg4: memref<32x16xf32, #tpu.memory_space<vmem>>, %arg5: memref<1x16xf32, #tpu.memory_space<vmem>>, %arg6: memref<1x16xf32, #tpu.memory_space<vmem>>, %arg7: memref<1x1xf32, #tpu.memory_space<vmem>>, %arg8: memref<1x128xf32, #tpu.memory_space<vmem>>) attributes {dimension_semantics = [#tpu.dimension_semantics<parallel>], iteration_bounds = array<i64: 2>, scalar_prefetch = 0 : i64, scratch_operands = 0 : i64, tpu.core_type = #tpu.core_type<tc>, window_params = [{transform_indices = @transform_0, window_bounds = array<i64: 128, 16>}, {pipeline_mode = #tpu.pipeline_mode<synchronous>, transform_indices = @transform_1, window_bounds = array<i64: 16, 32>}, {pipeline_mode = #tpu.pipeline_mode<synchronous>, transform_indices = @transform_2, window_bounds = array<i64: 1, 32>}, {pipeline_mode = #tpu.pipeline_mode<synchronous>, transform_indices = @transform_3, window_bounds = array<i64: 32, 16>}, {pipeline_mode = #tpu.pipeline_mode<synchronous>, transform_indices = @transform_4, window_bounds = array<i64: 1, 16>}, {pipeline_mode = #tpu.pipeline_mode<synchronous>, transform_indices = @transform_5, window_bounds = array<i64: 1, 16>}, {pipeline_mode = #tpu.pipeline_mode<synchronous>, transform_indices = @transform_6, window_bounds = array<i64: 1, 1>}, {transform_indices = @transform_7, window_bounds = array<i64: 1, 128>}]} {
    %c0 = arith.constant 0 : index
    %c0_0 = arith.constant 0 : index
    %0 = vector.load %arg1[%c0, %c0_0] : memref<128x16xf32, #tpu.memory_space<vmem>>, vector<128x16xf32>
    %c0_1 = arith.constant 0 : index
    %c0_2 = arith.constant 0 : index
    %1 = vector.load %arg2[%c0_1, %c0_2] : memref<16x32xf32, #tpu.memory_space<vmem>>, vector<16x32xf32>
    %cst = arith.constant dense<0.000000e+00> : vector<128x32xf32>
    %2 = tpu.matmul %0, %1, %cst {dimension_numbers = #tpu.dot_dimension_numbers<[1], [0], [0], [1], [0, 0, 1, 1], [], []>} : vector<128x16xf32>, vector<16x32xf32>, vector<128x32xf32> -> vector<128x32xf32>
    %c0_3 = arith.constant 0 : index
    %c0_4 = arith.constant 0 : index
    %3 = vector.load %arg3[%c0_3, %c0_4] : memref<1x32xf32, #tpu.memory_space<vmem>>, vector<1x32xf32>
    %4 = vector.broadcast %3 : vector<1x32xf32> to vector<128x32xf32>
    %5 = arith.addf %2, %4 : vector<128x32xf32>
    %cst_5 = arith.constant 0.000000e+00 : f32
    %6 = vector.broadcast %cst_5 : f32 to vector<128x32xf32>
    %7 = arith.maximumf %5, %6 : vector<128x32xf32>
    %c0_6 = arith.constant 0 : index
    %c0_7 = arith.constant 0 : index
    %8 = vector.load %arg4[%c0_6, %c0_7] : memref<32x16xf32, #tpu.memory_space<vmem>>, vector<32x16xf32>
    %cst_8 = arith.constant dense<0.000000e+00> : vector<128x16xf32>
    %9 = tpu.matmul %7, %8, %cst_8 {dimension_numbers = #tpu.dot_dimension_numbers<[1], [0], [0], [1], [0, 0, 1, 1], [], []>} : vector<128x32xf32>, vector<32x16xf32>, vector<128x16xf32> -> vector<128x16xf32>
    %c0_9 = arith.constant 0 : index
    %c0_10 = arith.constant 0 : index
    %10 = vector.load %arg5[%c0_9, %c0_10] : memref<1x16xf32, #tpu.memory_space<vmem>>, vector<1x16xf32>
    %11 = vector.broadcast %10 : vector<1x16xf32> to vector<128x16xf32>
    %12 = arith.addf %9, %11 : vector<128x16xf32>
    %cst_11 = arith.constant 0.000000e+00 : f32
    %13 = vector.broadcast %cst_11 : f32 to vector<128x16xf32>
    %14 = arith.maximumf %12, %13 : vector<128x16xf32>
    %c0_12 = arith.constant 0 : index
    %c0_13 = arith.constant 0 : index
    %15 = vector.load %arg6[%c0_12, %c0_13] : memref<1x16xf32, #tpu.memory_space<vmem>>, vector<1x16xf32>
    %cst_14 = arith.constant dense<0.000000e+00> : vector<1x128xf32>
    %16 = tpu.matmul %15, %14, %cst_14 {dimension_numbers = #tpu.dot_dimension_numbers<[1], [1], [0], [0], [0, 0, 1, 0], [], []>} : vector<1x16xf32>, vector<128x16xf32>, vector<1x128xf32> -> vector<1x128xf32>
    %c0_15 = arith.constant 0 : index
    %c0_16 = arith.constant 0 : index
    %17 = vector.load %arg7[%c0_15, %c0_16] : memref<1x1xf32, #tpu.memory_space<vmem>>, vector<1x1xf32>
    %18 = vector.broadcast %17 : vector<1x1xf32> to vector<1x128xf32>
    %19 = arith.addf %16, %18 : vector<1x128xf32>
    %c0_17 = arith.constant 0 : index
    %c0_18 = arith.constant 0 : index
    %20 = vector.load %arg8[%c0_17, %c0_18] : memref<1x128xf32, #tpu.memory_space<vmem>>, vector<1x128xf32>
    tpu.vector_store %arg8[%c0_17, %c0_18], %19 {strides = array<i32>} : memref<1x128xf32, #tpu.memory_space<vmem>>, vector<1x128xf32>,
    return
  }
  func.func @transform_0(%arg0: i32) -> (i32, i32) {
    %c0_i32 = arith.constant 0 : i32
    %c0_i32_0 = arith.constant 0 : i32
    return %arg0, %c0_i32 : i32, i32
  }
  func.func @transform_1(%arg0: i32) -> (i32, i32) {
    %c0_i32 = arith.constant 0 : i32
    %c0_i32_0 = arith.constant 0 : i32
    %c0_i32_1 = arith.constant 0 : i32
    return %c0_i32, %c0_i32_0 : i32, i32
  }
  func.func @transform_2(%arg0: i32) -> (i32, i32) {
    %c0_i32 = arith.constant 0 : i32
    %c0_i32_0 = arith.constant 0 : i32
    %c0_i32_1 = arith.constant 0 : i32
    return %c0_i32, %c0_i32_0 : i32, i32
  }
  func.func @transform_3(%arg0: i32) -> (i32, i32) {
    %c0_i32 = arith.constant 0 : i32
    %c0_i32_0 = arith.constant 0 : i32
    %c0_i32_1 = arith.constant 0 : i32
    return %c0_i32, %c0_i32_0 : i32, i32
  }
  func.func @transform_4(%arg0: i32) -> (i32, i32) {
    %c0_i32 = arith.constant 0 : i32
    %c0_i32_0 = arith.constant 0 : i32
    %c0_i32_1 = arith.constant 0 : i32
    return %c0_i32, %c0_i32_0 : i32, i32
  }
  func.func @transform_5(%arg0: i32) -> (i32, i32) {
    %c0_i32 = arith.constant 0 : i32
    %c0_i32_0 = arith.constant 0 : i32
    %c0_i32_1 = arith.constant 0 : i32
    return %c0_i32, %c0_i32_0 : i32, i32
  }
  func.func @transform_6(%arg0: i32) -> (i32, i32) {
    %c0_i32 = arith.constant 0 : i32
    %c0_i32_0 = arith.constant 0 : i32
    %c0_i32_1 = arith.constant 0 : i32
    return %c0_i32, %c0_i32_0 : i32, i32
  }
  func.func @transform_7(%arg0: i32) -> (i32, i32) {
    %c0_i32 = arith.constant 0 : i32
    %c0_i32_0 = arith.constant 0 : i32
    return %c0_i32, %arg0 : i32, i32
  }
}

</mosaic_0001>

<llo_original>
// kernel: tpu_custom_call.1
$region0: #{tpu_custom_call.1}
  #allocation0 [shape = 'u32[]', space=smem, size = 0x4, offset = 0x4, fixed_abs, tag = 'smem constant byte address 0x4 - core index']
  #allocation1 [shape = 'u32[144,128]{1,0:T(1,128)}', space=vmem, size = 0x12000, scoped, tag = 'internal scratch']
  #allocation2 [shape = 'f32[1,1]{1,0:T(1,128)S(1)}', space=vmem, size = 0x200, scoped, tag = 'scoped memory for tpu_custom_call.1']
  %s0 = inlined_call_operand.vmem [shape: f32[256,16], index: 0, kind: input, shape index: {}]
  %s1 = inlined_call_operand.vmem [shape: f32[16,32], index: 1, kind: input, shape index: {}]
  %s2 = inlined_call_operand.vmem [shape: f32[1,32], index: 2, kind: input, shape index: {}]
  %s3 = inlined_call_operand.vmem [shape: f32[32,16], index: 3, kind: input, shape index: {}]
  %s4 = inlined_call_operand.vmem [shape: f32[1,16], index: 4, kind: input, shape index: {}]
  %s5 = inlined_call_operand.vmem [shape: f32[1,16], index: 5, kind: input, shape index: {}]
  %s6 = inlined_call_operand.<no memory space> [shape: f32[1,1], index: 6, kind: input, shape index: {}]
  %s7 = inlined_call_operand.hbm [shape: f32[1,256], index: 7, kind: output, shape index: {}]
  %s8 = sld [smem:[#allocation0]]
  $region61: #{tpu_custom_call.1} parent=0
    _
  %s10 = ssub.s32 1, %s8
  %s11 = scalar_select 0, %s10, %s8
  %v12 = vstv %s6
  %13 = vst [vmem:[#allocation2] sm:$0x1] %v12
  $region1: #{tpu_custom_call.1} parent=0
    #allocation3 [shape = 'u8[1024]{0}', space=vmem, size = 0x400, scoped, tag = 'output window, operand 0']
    #allocation4 [shape = 's32[2]{0}', space=sflag, size = 0x8, scoped, tag = 'scoped memory for tpu_custom_call.1']
    %14 = vsyncpa [#allocation4], 0
    %s15 = scalar_lea.sflag [#allocation4], 1
    %16 = vsyncpa %s15, 0
    loop: start=0, step=1, limit=4
    $region2: #{tpu_custom_call.1} parent=1 // loop_pre_header
      _
    $region3: #{tpu_custom_call.1} parent=1 // loop_header
      %s18 = sphi 0, %s22
      %p19 = scmp.ge.s32.totalorder %s18, 4
      %s28 = sphi 0, %s30
      %s31 = sphi 0, %s28
      %s32 = sphi 0, %s31
      %s48 = sphi 0, %s32
      %s52 = sphi 0, %s52
      %s54 = sphi 0, %s52
      %s55 = sphi 0, %s54
      %s69 = sphi 0, %s55
      %s73 = sphi 0, %s73
      %s75 = sphi 0, %s73
      %s76 = sphi 0, %s75
      %s90 = sphi 0, %s76
      %s94 = sphi 0, %s94
      %s96 = sphi 0, %s94
      %s97 = sphi 0, %s96
      %s111 = sphi 0, %s97
      %s115 = sphi 0, %s115
      %s117 = sphi 0, %s115
      %s118 = sphi 0, %s117
      %s132 = sphi 0, %s118
      %s136 = sphi 0, %s136
      %s138 = sphi 0, %s136
      %s139 = sphi 0, %s138
      %s153 = sphi 0, %s139
      %s157 = sphi 0, %s157
      %s159 = sphi 0, %s157
      %s160 = sphi 0, %s159
      %s174 = sphi 0, %s160
      %s180 = sphi 0, %s182
      %s183 = sphi 0, %s180
      %s184 = sphi 0, %s183
      %s200 = sphi 0, %s184
    $region4: #{tpu_custom_call.1} parent=1 // loop_header_branch
      %21 = sbr.rel (%p19) target = $region8
    $region5: #{tpu_custom_call.1} parent=1 // loop_body
      %s23 = ssub.s32 %s18, 1
      %s24 = ssub.s32 %s18, 2
      %s25 = sadd.s32 %s18, 1
      %s26 = ssub.s32 %s18, %s25
      %p27 = scmp.eq.s32.totalorder %s26, 0
      %s29 = sadd.s32 %s28, 1
      %s30 = scalar_select %p27, %s28, %s29
      %p33 = pneg %p27
      %p34 = scmp.eq.s32.totalorder %s18, 1
      %p35 = por %p33, %p34
      %p36 = scmp.ne.s32.totalorder %s28, %s31
      %p37 = scmp.eq.s32.totalorder %s18, 0
      %p38 = por %p36, %p37
      %p39 = scmp.ne.s32.totalorder %s28, %s31
      %p40 = scmp.eq.s32.totalorder %s23, 1
      %p41 = por %p39, %p40
      %p42 = scmp.ne.s32.totalorder %s31, %s32
      %p43 = scmp.eq.s32.totalorder %s23, 0
      %p44 = por %p42, %p43
      %p45 = scmp.ne.s32.totalorder %s31, %s32
      %p46 = scmp.eq.s32.totalorder %s24, 1
      %p47 = por %p45, %p46
      %p49 = scmp.ne.s32.totalorder %s32, %s48
      %p50 = scmp.eq.s32.totalorder %s24, 0
      %p51 = por %p49, %p50
      %s53 = sadd.s32 %s52, 1
      %p56 = scmp.eq.s32.totalorder %s18, 1
      %p57 = scmp.ne.s32.totalorder %s52, %s54
      %p58 = scmp.eq.s32.totalorder %s18, 0
      %p59 = por %p57, %p58
      %p60 = scmp.ne.s32.totalorder %s52, %s54
      %p61 = scmp.eq.s32.totalorder %s23, 1
      %p62 = por %p60, %p61
      %p63 = scmp.ne.s32.totalorder %s54, %s55
      %p64 = scmp.eq.s32.totalorder %s23, 0
      %p65 = por %p63, %p64
      %p66 = scmp.ne.s32.totalorder %s54, %s55
      %p67 = scmp.eq.s32.totalorder %s24, 1
      %p68 = por %p66, %p67
      %p70 = scmp.ne.s32.totalorder %s55, %s69
      %p71 = scmp.eq.s32.totalorder %s24, 0
      %p72 = por %p70, %p71
      %s74 = sadd.s32 %s73, 1
      %p77 = scmp.eq.s32.totalorder %s18, 1
      %p78 = scmp.ne.s32.totalorder %s73, %s75
      %p79 = scmp.eq.s32.totalorder %s18, 0
      %p80 = por %p78, %p79
      %p81 = scmp.ne.s32.totalorder %s73, %s75
      %p82 = scmp.eq.s32.totalorder %s23, 1
      %p83 = por %p81, %p82
      %p84 = scmp.ne.s32.totalorder %s75, %s76
      %p85 = scmp.eq.s32.totalorder %s23, 0
      %p86 = por %p84, %p85
      %p87 = scmp.ne.s32.totalorder %s75, %s76
      %p88 = scmp.eq.s32.totalorder %s24, 1
      %p89 = por %p87, %p88
      %p91 = scmp.ne.s32.totalorder %s76, %s90
      %p92 = scmp.eq.s32.totalorder %s24, 0
      %p93 = por %p91, %p92
      %s95 = sadd.s32 %s94, 1
      %p98 = scmp.eq.s32.totalorder %s18, 1
      %p99 = scmp.ne.s32.totalorder %s94, %s96
      %p100 = scmp.eq.s32.totalorder %s18, 0
      %p101 = por %p99, %p100
      %p102 = scmp.ne.s32.totalorder %s94, %s96
      %p103 = scmp.eq.s32.totalorder %s23, 1
      %p104 = por %p102, %p103
      %p105 = scmp.ne.s32.totalorder %s96, %s97
      %p106 = scmp.eq.s32.totalorder %s23, 0
      %p107 = por %p105, %p106
      %p108 = scmp.ne.s32.totalorder %s96, %s97
      %p109 = scmp.eq.s32.totalorder %s24, 1
      %p110 = por %p108, %p109
      %p112 = scmp.ne.s32.totalorder %s97, %s111
      %p113 = scmp.eq.s32.totalorder %s24, 0
      %p114 = por %p112, %p113
      %s116 = sadd.s32 %s115, 1
      %p119 = scmp.eq.s32.totalorder %s18, 1
      %p120 = scmp.ne.s32.totalorder %s115, %s117
      %p121 = scmp.eq.s32.totalorder %s18, 0
      %p122 = por %p120, %p121
      %p123 = scmp.ne.s32.totalorder %s115, %s117
      %p124 = scmp.eq.s32.totalorder %s23, 1
      %p125 = por %p123, %p124
      %p126 = scmp.ne.s32.totalorder %s117, %s118
      %p127 = scmp.eq.s32.totalorder %s23, 0
      %p128 = por %p126, %p127
      %p129 = scmp.ne.s32.totalorder %s117, %s118
      %p130 = scmp.eq.s32.totalorder %s24, 1
      %p131 = por %p129, %p130
      %p133 = scmp.ne.s32.totalorder %s118, %s132
      %p134 = scmp.eq.s32.totalorder %s24, 0
      %p135 = por %p133, %p134
      %s137 = sadd.s32 %s136, 1
      %p140 = scmp.eq.s32.totalorder %s18, 1
      %p141 = scmp.ne.s32.totalorder %s136, %s138
      %p142 = scmp.eq.s32.totalorder %s18, 0
      %p143 = por %p141, %p142
      %p144 = scmp.ne.s32.totalorder %s136, %s138
      %p145 = scmp.eq.s32.totalorder %s23, 1
      %p146 = por %p144, %p145
      %p147 = scmp.ne.s32.totalorder %s138, %s139
      %p148 = scmp.eq.s32.totalorder %s23, 0
      %p149 = por %p147, %p148
      %p150 = scmp.ne.s32.totalorder %s138, %s139
      %p151 = scmp.eq.s32.totalorder %s24, 1
      %p152 = por %p150, %p151
      %p154 = scmp.ne.s32.totalorder %s139, %s153
      %p155 = scmp.eq.s32.totalorder %s24, 0
      %p156 = por %p154, %p155
      %s158 = sadd.s32 %s157, 1
      %p161 = scmp.eq.s32.totalorder %s18, 1
      %p162 = scmp.ne.s32.totalorder %s157, %s159
      %p163 = scmp.eq.s32.totalorder %s18, 0
      %p164 = por %p162, %p163
      %p165 = scmp.ne.s32.totalorder %s157, %s159
      %p166 = scmp.eq.s32.totalorder %s23, 1
      %p167 = por %p165, %p166
      %p168 = scmp.ne.s32.totalorder %s159, %s160
      %p169 = scmp.eq.s32.totalorder %s23, 0
      %p170 = por %p168, %p169
      %p171 = scmp.ne.s32.totalorder %s159, %s160
      %p172 = scmp.eq.s32.totalorder %s24, 1
      %p173 = por %p171, %p172
      %p175 = scmp.ne.s32.totalorder %s160, %s174
      %p176 = scmp.eq.s32.totalorder %s24, 0
      %p177 = por %p175, %p176
      %s178 = ssub.s32 %s18, %s25
      %p179 = scmp.eq.s32.totalorder %s178, 0
      %s181 = sadd.s32 %s180, 1
      %s182 = scalar_select %p179, %s180, %s181
      %p185 = pneg %p179
      %p186 = scmp.eq.s32.totalorder %s18, 1
      %p187 = por %p185, %p186
      %p188 = scmp.ne.s32.totalorder %s180, %s183
      %p189 = scmp.eq.s32.totalorder %s18, 0
      %p190 = por %p188, %p189
      %p191 = scmp.ne.s32.totalorder %s180, %s183
      %p192 = scmp.eq.s32.totalorder %s23, 1
      %p193 = por %p191, %p192
      %p194 = scmp.ne.s32.totalorder %s183, %s184
      %p195 = scmp.eq.s32.totalorder %s23, 0
      %p196 = por %p194, %p195
      %p197 = scmp.ne.s32.totalorder %s183, %s184
      %p198 = scmp.eq.s32.totalorder %s24, 1
      %p199 = por %p197, %p198
      %p201 = scmp.ne.s32.totalorder %s184, %s200
      %p202 = scmp.eq.s32.totalorder %s24, 0
      %p203 = por %p201, %p202
      %p204 = scmp.le.s32.totalorder 1, %s18
      %p205 = scmp.lt.s32.totalorder %s18, 3
      %p206 = pnand %p204, %p205
      %p207 = pneg %p206
      // Predicated region
      $region9: #{tpu_custom_call.1} parent=5 // pred_check
        _
      $region10: #{tpu_custom_call.1} parent=5 // pred_check_branch
        %209 = sbr.rel (%p206) target = $region12
      $region11: #{tpu_custom_call.1} parent=5 // pred_region
        %s210 = ssub.s32 %s18, 1
        // Predicated region
        $region13: #{tpu_custom_call.1} parent=11 // pred_check
          %p211 = pneg %p65
        $region14: #{tpu_custom_call.1} parent=11 // pred_check_branch
          %213 = sbr.rel (%p211) target = $region16
        $region15: #{tpu_custom_call.1} parent=11 // pred_region
          _
        $region16: #{tpu_custom_call.1} parent=11 // pred_fallthru
          _
        // Predicated region
        $region17: #{tpu_custom_call.1} parent=11 // pred_check
          %p214 = pneg %p86
        $region18: #{tpu_custom_call.1} parent=11 // pred_check_branch
          %216 = sbr.rel (%p214) target = $region20
        $region19: #{tpu_custom_call.1} parent=11 // pred_region
          _
        $region20: #{tpu_custom_call.1} parent=11 // pred_fallthru
          _
        // Predicated region
        $region21: #{tpu_custom_call.1} parent=11 // pred_check
          %p217 = pneg %p107
        $region22: #{tpu_custom_call.1} parent=11 // pred_check_branch
          %219 = sbr.rel (%p217) target = $region24
        $region23: #{tpu_custom_call.1} parent=11 // pred_region
          _
        $region24: #{tpu_custom_call.1} parent=11 // pred_fallthru
          _
        // Predicated region
        $region25: #{tpu_custom_call.1} parent=11 // pred_check
          %p220 = pneg %p128
        $region26: #{tpu_custom_call.1} parent=11 // pred_check_branch
          %222 = sbr.rel (%p220) target = $region28
        $region27: #{tpu_custom_call.1} parent=11 // pred_region
          _
        $region28: #{tpu_custom_call.1} parent=11 // pred_fallthru
          _
        // Predicated region
        $region29: #{tpu_custom_call.1} parent=11 // pred_check
          %p223 = pneg %p149
        $region30: #{tpu_custom_call.1} parent=11 // pred_check_branch
          %225 = sbr.rel (%p223) target = $region32
        $region31: #{tpu_custom_call.1} parent=11 // pred_region
          _
        $region32: #{tpu_custom_call.1} parent=11 // pred_fallthru
          _
        // Predicated region
        $region33: #{tpu_custom_call.1} parent=11 // pred_check
          %p226 = pneg %p170
        $region34: #{tpu_custom_call.1} parent=11 // pred_check_branch
          %228 = sbr.rel (%p226) target = $region36
        $region35: #{tpu_custom_call.1} parent=11 // pred_region
          _
        $region36: #{tpu_custom_call.1} parent=11 // pred_fallthru
          _
      $region12: #{tpu_custom_call.1} parent=5 // pred_fallthru
        _
      %p229 = scmp.lt.s32.totalorder %s18, 2
      // Predicated region
      $region37: #{tpu_custom_call.1} parent=5 // pred_check
        %p230 = pneg %p229
      $region38: #{tpu_custom_call.1} parent=5 // pred_check_branch
        %232 = sbr.rel (%p230) target = $region40
      $region39: #{tpu_custom_call.1} parent=5 // pred_region
        // Predicated region
        $region41: #{tpu_custom_call.1} parent=39 // pred_check
          %p233 = pneg %p38
        $region42: #{tpu_custom_call.1} parent=39 // pred_check_branch
          %235 = sbr.rel (%p233) target = $region44
        $region43: #{tpu_custom_call.1} parent=39 // pred_region
          %s236 = smul.u32 16, %s18
          %p237 = scmp.lt.s32.totalorder %s236, 31
          %s238 = scalar_select %p237, %s236, 31
          %s239 = smul.addr %s238, 8
          %s240 = scalar_lea.vmem %s0, %s239
          %s241 = smul.u32 16, %s18
        $region44: #{tpu_custom_call.1} parent=39 // pred_fallthru
          _
      $region40: #{tpu_custom_call.1} parent=5 // pred_fallthru
        _
      %p242 = scmp.le.s32.totalorder 1, %s18
      %p243 = scmp.lt.s32.totalorder %s18, 3
      %p244 = pnand %p242, %p243
      %p245 = pneg %p244
      // Predicated region
      $region45: #{tpu_custom_call.1} parent=5 // pred_check
        _
      $region46: #{tpu_custom_call.1} parent=5 // pred_check_branch
        %247 = sbr.rel (%p244) target = $region48
      $region47: #{tpu_custom_call.1} parent=5 // pred_region
        %s248 = ssub.s32 %s18, 1
        %s249 = smul.u32 16, %s23
        %p250 = scmp.lt.s32.totalorder %s249, 31
        %s251 = scalar_select %p250, %s249, 31
        %s252 = smul.addr %s251, 8
        %s253 = scalar_lea.vmem %s0, %s252
        %p254 = pneg %p44
        %p255 = pneg %p41
        %p256 = pneg %p65
        %p257 = pneg %p62
        %p258 = pneg %p86
        %p259 = pneg %p83
        %p260 = pneg %p107
        %p261 = pneg %p104
        %p262 = pneg %p128
        %p263 = pneg %p125
        %p264 = pneg %p149
        %p265 = pneg %p146
        %p266 = pneg %p170
        %p267 = pneg %p167
        %p268 = pneg %p196
        %p269 = pneg %p193
        %s270 = sand.u32 %s183, 1
        %s271 = scalar_lea.sflag [#allocation4], %s270
        %s272 = sand.u32 %s183, 1
        %s273 = scalar_lea.vmem [#allocation3], %s272
        %s274 = smul.u32 16, %s23
        %p275 = scmp.lt.s32.totalorder %s274, 31
        %s276 = scalar_select %p275, %s274, 31
        %s277 = smul.addr %s276, 8
        %s278 = scalar_lea.vmem %s0, %s277
        %s279 = smul.u32 16, %s23
        %v280 = vld [vmem:[%s278] sm:$0xff]
        %v281 = vld [vmem:[%s278 + $0x8] sm:$0xff]
        %v282 = vld [vmem:[%s278 + $0x10] sm:$0xff]
        %v283 = vld [vmem:[%s278 + $0x18] sm:$0xff]
        %v284 = vld [vmem:[%s278 + $0x20] sm:$0xff]
        %v285 = vld [vmem:[%s278 + $0x28] sm:$0xff]
        %v286 = vld [vmem:[%s278 + $0x30] sm:$0xff]
        %v287 = vld [vmem:[%s278 + $0x38] sm:$0xff]
        %v288 = vld [vmem:[%s278 + $0x40] sm:$0xff]
        %v289 = vld [vmem:[%s278 + $0x48] sm:$0xff]
        %v290 = vld [vmem:[%s278 + $0x50] sm:$0xff]
        %v291 = vld [vmem:[%s278 + $0x58] sm:$0xff]
        %v292 = vld [vmem:[%s278 + $0x60] sm:$0xff]
        %v293 = vld [vmem:[%s278 + $0x68] sm:$0xff]
        %v294 = vld [vmem:[%s278 + $0x70] sm:$0xff]
        %v295 = vld [vmem:[%s278 + $0x78] sm:$0xff]
        %v296 = vld [vmem:[%s1] sm:$0xff]
        %v297 = vld [vmem:[%s1 + $0x8] sm:$0xff]
        %v298 = vld [vmem:[%s2] sm:$0x1]
        %v300 = vlaneseq
        %v301 = vshrl.u32 %v300, 7
        %v302 = vsub.s32 0, %v301
        %v303 = vrot.slane %v298, %v302
        %vm305 = vcmask 130048
        %v307 = vsel %vm305, %v280, 0
        %v310 = vsel %vm305, %v281, 0
        %v313 = vsel %vm305, %v282, 0
        %v316 = vsel %vm305, %v283, 0
        %v319 = vsel %vm305, %v284, 0
        %v322 = vsel %vm305, %v285, 0
        %v325 = vsel %vm305, %v286, 0
        %v328 = vsel %vm305, %v287, 0
        %v331 = vsel %vm305, %v288, 0
        %v334 = vsel %vm305, %v289, 0
        %v337 = vsel %vm305, %v290, 0
        %v340 = vsel %vm305, %v291, 0
        %v343 = vsel %vm305, %v292, 0
        %v346 = vsel %vm305, %v293, 0
        %v349 = vsel %vm305, %v294, 0
        %v352 = vsel %vm305, %v295, 0
        %354 = vmatprep.subr.mxu0 0.0
        %355 = vmatpush1.msra.mxu0 %v296
        %356 = vmatprep.subr.mxu0 0.0
        %357 = vmatpush1.msra.mxu0 %v297
        %358 = vmatprep.subr.mxu0 0.0
        %359 = vmatpush1.msra.mxu0 0.0
        %360 = vmatprep.subr.mxu0 0.0
        %361 = vmatpush1.msra.mxu0 0.0
        %362 = vmatprep.subr.mxu0 0.0
        %363 = vmatpush1.msra.mxu0 0.0
        %364 = vmatprep.subr.mxu0 0.0
        %365 = vmatpush1.msra.mxu0 0.0
        %366 = vmatprep.subr.mxu0 0.0
        %367 = vmatpush1.msra.mxu0 0.0
        %368 = vmatprep.subr.mxu0 0.0
        %369 = vmatpush1.msra.mxu0 0.0
        %370 = vmatprep.subr.mxu0 0.0
        %371 = vmatpush1.msra.mxu0 0.0
        %372 = vmatprep.subr.mxu0 0.0
        %373 = vmatpush1.msra.mxu0 0.0
        %374 = vmatprep.subr.mxu0 0.0
        %375 = vmatpush1.msra.mxu0 0.0
        %376 = vmatprep.subr.mxu0 0.0
        %377 = vmatpush1.msra.mxu0 0.0
        %378 = vmatprep.subr.mxu0 0.0
        %379 = vmatpush1.msra.mxu0 0.0
        %380 = vmatprep.subr.mxu0 0.0
        %381 = vmatpush1.msra.mxu0 0.0
        %382 = vmatprep.subr.mxu0 0.0
        %383 = vmatpush1.msra.mxu0 0.0
        %384 = vmatprep.subr.mxu0 0.0
        %385 = vmatpush1.msra.mxu0 0.0
        %386 = vmatprep.subr.mxu0 0.0
        %387 = vmatpush1.msra.mxu0 0.0
        %388 = vmatprep.subr.mxu0 0.0
        %389 = vmatpush1.msra.mxu0 0.0
        %390 = vmatprep.subr.mxu0 0.0
        %391 = vmatpush1.msra.mxu0 0.0
        %392 = vmatprep.subr.mxu0 0.0
        %393 = vmatpush1.msra.mxu0 0.0
        %394 = vmatprep.subr.mxu0 0.0
        %395 = vmatpush1.msra.mxu0 0.0
        %396 = vmatprep.subr.mxu0 0.0
        %397 = vmatpush1.msra.mxu0 0.0
        %398 = vmatprep.subr.mxu0 0.0
        %399 = vmatpush1.msra.mxu0 0.0
        %400 = vmatprep.subr.mxu0 0.0
        %401 = vmatpush1.msra.mxu0 0.0
        %402 = vmatprep.subr.mxu0 0.0
        %403 = vmatpush1.msra.mxu0 0.0
        %404 = vmatprep.subr.mxu0 0.0
        %405 = vmatpush1.msra.mxu0 0.0
        %406 = vmatprep.subr.mxu0 0.0
        %407 = vmatpush1.msra.mxu0 0.0
        %408 = vmatprep.subr.mxu0 0.0
        %409 = vmatpush1.msra.mxu0 0.0
        %410 = vmatprep.subr.mxu0 0.0
        %411 = vmatpush1.msra.mxu0 0.0
        %412 = vmatprep.subr.mxu0 0.0
        %413 = vmatpush1.msra.mxu0 0.0
        %414 = vmatprep.subr.mxu0 0.0
        %415 = vmatpush1.msra.mxu0 0.0
        %416 = vmatprep.subr.mxu0 0.0
        %417 = vmatpush1.msra.mxu0 0.0
        %418 = vmatprep.mubr.f32.mxu0 0.0
        %419 = vmatmul.mubr.f32.gmra.mrb[0].mxu0 %v307
        %v420 = vpop.f32.mrb[0].mxu0
        %v421 = vadd.f32 %v303, %v420
        %v422 = vpop.f32.mrb[0].mxu0
        %423 = vmatprep.mubr.f32.mxu0 0.0
        %424 = vmatmul.mubr.f32.gmra.mrb[0].mxu0 %v310
        %v425 = vpop.f32.mrb[0].mxu0
        %v426 = vadd.f32 %v303, %v425
        %v427 = vpop.f32.mrb[0].mxu0
        %428 = vmatprep.mubr.f32.mxu0 0.0
        %429 = vmatmul.mubr.f32.gmra.mrb[0].mxu0 %v313
        %v430 = vpop.f32.mrb[0].mxu0
        %v431 = vadd.f32 %v303, %v430
        %v432 = vpop.f32.mrb[0].mxu0
        %433 = vmatprep.mubr.f32.mxu0 0.0
        %434 = vmatmul.mubr.f32.gmra.mrb[0].mxu0 %v316
        %v435 = vpop.f32.mrb[0].mxu0
        %v436 = vadd.f32 %v303, %v435
        %v437 = vpop.f32.mrb[0].mxu0
        %438 = vmatprep.mubr.f32.mxu0 0.0
        %439 = vmatmul.mubr.f32.gmra.mrb[0].mxu0 %v319
        %v440 = vpop.f32.mrb[0].mxu0
        %v441 = vadd.f32 %v303, %v440
        %v442 = vpop.f32.mrb[0].mxu0
        %443 = vmatprep.mubr.f32.mxu0 0.0
        %444 = vmatmul.mubr.f32.gmra.mrb[0].mxu0 %v322
        %v445 = vpop.f32.mrb[0].mxu0
        %v446 = vadd.f32 %v303, %v445
        %v447 = vpop.f32.mrb[0].mxu0
        %448 = vmatprep.mubr.f32.mxu0 0.0
        %449 = vmatmul.mubr.f32.gmra.mrb[0].mxu0 %v325
        %v450 = vpop.f32.mrb[0].mxu0
        %v451 = vadd.f32 %v303, %v450
        %v452 = vpop.f32.mrb[0].mxu0
        %453 = vmatprep.mubr.f32.mxu0 0.0
        %454 = vmatmul.mubr.f32.gmra.mrb[0].mxu0 %v328
        %v455 = vpop.f32.mrb[0].mxu0
        %v456 = vadd.f32 %v303, %v455
        %v457 = vpop.f32.mrb[0].mxu0
        %458 = vmatprep.mubr.f32.mxu0 0.0
        %459 = vmatmul.mubr.f32.gmra.mrb[0].mxu0 %v331
        %v460 = vpop.f32.mrb[0].mxu0
        %v461 = vadd.f32 %v303, %v460
        %v462 = vpop.f32.mrb[0].mxu0
        %463 = vmatprep.mubr.f32.mxu0 0.0
        %464 = vmatmul.mubr.f32.gmra.mrb[0].mxu0 %v334
        %v465 = vpop.f32.mrb[0].mxu0
        %v466 = vadd.f32 %v303, %v465
        %v467 = vpop.f32.mrb[0].mxu0
        %468 = vmatprep.mubr.f32.mxu0 0.0
        %469 = vmatmul.mubr.f32.gmra.mrb[0].mxu0 %v337
        %v470 = vpop.f32.mrb[0].mxu0
        %v471 = vadd.f32 %v303, %v470
        %v472 = vpop.f32.mrb[0].mxu0
        %473 = vmatprep.mubr.f32.mxu0 0.0
        %474 = vmatmul.mubr.f32.gmra.mrb[0].mxu0 %v340
        %v475 = vpop.f32.mrb[0].mxu0
        %v476 = vadd.f32 %v303, %v475
        %v477 = vpop.f32.mrb[0].mxu0
        %478 = vmatprep.mubr.f32.mxu0 0.0
        %479 = vmatmul.mubr.f32.gmra.mrb[0].mxu0 %v343
        %v480 = vpop.f32.mrb[0].mxu0
        %v481 = vadd.f32 %v303, %v480
        %v482 = vpop.f32.mrb[0].mxu0
        %483 = vmatprep.mubr.f32.mxu0 0.0
        %484 = vmatmul.mubr.f32.gmra.mrb[0].mxu0 %v346
        %v485 = vpop.f32.mrb[0].mxu0
        %v486 = vadd.f32 %v303, %v485
        %v487 = vpop.f32.mrb[0].mxu0
        %488 = vmatprep.mubr.f32.mxu0 0.0
        %489 = vmatmul.mubr.f32.gmra.mrb[0].mxu0 %v349
        %v490 = vpop.f32.mrb[0].mxu0
        %v491 = vadd.f32 %v303, %v490
        %v492 = vpop.f32.mrb[0].mxu0
        %493 = vmatprep.mubr.f32.mxu0 0.0
        %494 = vmatmul.mubr.f32.gmra.mrb[0].mxu0 %v352
        %v495 = vpop.f32.mrb[0].mxu0
        %v496 = vadd.f32 %v303, %v495
        %v497 = vpop.f32.mrb[0].mxu0
        %498 = vdwg.mxu0
        %v499 = vmax.f32 %v421, 0.0
        %v500 = vmax.f32 %v426, 0.0
        %v501 = vmax.f32 %v431, 0.0
        %v502 = vmax.f32 %v436, 0.0
        %v503 = vmax.f32 %v441, 0.0
        %v504 = vmax.f32 %v446, 0.0
        %v505 = vmax.f32 %v451, 0.0
        %v506 = vmax.f32 %v456, 0.0
        %v507 = vmax.f32 %v461, 0.0
        %v508 = vmax.f32 %v466, 0.0
        %v509 = vmax.f32 %v471, 0.0
        %v510 = vmax.f32 %v476, 0.0
        %v511 = vmax.f32 %v481, 0.0
        %v512 = vmax.f32 %v486, 0.0
        %v513 = vmax.f32 %v491, 0.0
        %v514 = vmax.f32 %v496, 0.0
        %v515 = vld [vmem:[%s3] sm:$0xff]
        %v516 = vld [vmem:[%s3 + $0x8] sm:$0xff]
        %v517 = vld [vmem:[%s3 + $0x10] sm:$0xff]
        %v518 = vld [vmem:[%s3 + $0x18] sm:$0xff]
        %v519 = vld [vmem:[%s4] sm:$0x1]
        %v521 = vlaneseq
        %v522 = vshrl.u32 %v521, 7
        %v523 = vsub.s32 0, %v522
        %v524 = vrot.slane %v519, %v523
        %vm526 = vcmask 261120
        %v528 = vsel %vm526, %v499, 0
        %v531 = vsel %vm526, %v500, 0
        %v534 = vsel %vm526, %v501, 0
        %v537 = vsel %vm526, %v502, 0
        %v540 = vsel %vm526, %v503, 0
        %v543 = vsel %vm526, %v504, 0
        %v546 = vsel %vm526, %v505, 0
        %v549 = vsel %vm526, %v506, 0
        %v552 = vsel %vm526, %v507, 0
        %v555 = vsel %vm526, %v508, 0
        %v558 = vsel %vm526, %v509, 0
        %v561 = vsel %vm526, %v510, 0
        %v564 = vsel %vm526, %v511, 0
        %v567 = vsel %vm526, %v512, 0
        %v570 = vsel %vm526, %v513, 0
        %v573 = vsel %vm526, %v514, 0
        %575 = vmatprep.subr.mxu0 0.0
        %576 = vmatpush1.msra.mxu0 %v515
        %577 = vmatprep.subr.mxu0 0.0
        %578 = vmatpush1.msra.mxu0 %v516
        %579 = vmatprep.subr.mxu0 0.0
        %580 = vmatpush1.msra.mxu0 %v517
        %581 = vmatprep.subr.mxu0 0.0
        %582 = vmatpush1.msra.mxu0 %v518
        %583 = vmatprep.subr.mxu0 0.0
        %584 = vmatpush1.msra.mxu0 0.0
        %585 = vmatprep.subr.mxu0 0.0
        %586 = vmatpush1.msra.mxu0 0.0
        %587 = vmatprep.subr.mxu0 0.0
        %588 = vmatpush1.msra.mxu0 0.0
        %589 = vmatprep.subr.mxu0 0.0
        %590 = vmatpush1.msra.mxu0 0.0
        %591 = vmatprep.subr.mxu0 0.0
        %592 = vmatpush1.msra.mxu0 0.0
        %593 = vmatprep.subr.mxu0 0.0
        %594 = vmatpush1.msra.mxu0 0.0
        %595 = vmatprep.subr.mxu0 0.0
        %596 = vmatpush1.msra.mxu0 0.0
        %597 = vmatprep.subr.mxu0 0.0
        %598 = vmatpush1.msra.mxu0 0.0
        %599 = vmatprep.subr.mxu0 0.0
        %600 = vmatpush1.msra.mxu0 0.0
        %601 = vmatprep.subr.mxu0 0.0
        %602 = vmatpush1.msra.mxu0 0.0
        %603 = vmatprep.subr.mxu0 0.0
        %604 = vmatpush1.msra.mxu0 0.0
        %605 = vmatprep.subr.mxu0 0.0
        %606 = vmatpush1.msra.mxu0 0.0
        %607 = vmatprep.subr.mxu0 0.0
        %608 = vmatpush1.msra.mxu0 0.0
        %609 = vmatprep.subr.mxu0 0.0
        %610 = vmatpush1.msra.mxu0 0.0
        %611 = vmatprep.subr.mxu0 0.0
        %612 = vmatpush1.msra.mxu0 0.0
        %613 = vmatprep.subr.mxu0 0.0
        %614 = vmatpush1.msra.mxu0 0.0
        %615 = vmatprep.subr.mxu0 0.0
        %616 = vmatpush1.msra.mxu0 0.0
        %617 = vmatprep.subr.mxu0 0.0
        %618 = vmatpush1.msra.mxu0 0.0
        %619 = vmatprep.subr.mxu0 0.0
        %620 = vmatpush1.msra.mxu0 0.0
        %621 = vmatprep.subr.mxu0 0.0
        %622 = vmatpush1.msra.mxu0 0.0
        %623 = vmatprep.subr.mxu0 0.0
        %624 = vmatpush1.msra.mxu0 0.0
        %625 = vmatprep.subr.mxu0 0.0
        %626 = vmatpush1.msra.mxu0 0.0
        %627 = vmatprep.subr.mxu0 0.0
        %628 = vmatpush1.msra.mxu0 0.0
        %629 = vmatprep.subr.mxu0 0.0
        %630 = vmatpush1.msra.mxu0 0.0
        %631 = vmatprep.subr.mxu0 0.0
        %632 = vmatpush1.msra.mxu0 0.0
        %633 = vmatprep.subr.mxu0 0.0
        %634 = vmatpush1.msra.mxu0 0.0
        %635 = vmatprep.subr.mxu0 0.0
        %636 = vmatpush1.msra.mxu0 0.0
        %637 = vmatprep.subr.mxu0 0.0
        %638 = vmatpush1.msra.mxu0 0.0
        %639 = vmatprep.mubr.f32.mxu0 0.0
        %640 = vmatmul.mubr.f32.gmra.mrb[0].mxu0 %v528
        %v641 = vpop.f32.mrb[0].mxu0
        %v642 = vadd.f32 %v524, %v641
        %v643 = vpop.f32.mrb[0].mxu0
        %644 = vmatprep.mubr.f32.mxu0 0.0
        %645 = vmatmul.mubr.f32.gmra.mrb[0].mxu0 %v531
        %v646 = vpop.f32.mrb[0].mxu0
        %v647 = vadd.f32 %v524, %v646
        %v648 = vpop.f32.mrb[0].mxu0
        %649 = vmatprep.mubr.f32.mxu0 0.0
        %650 = vmatmul.mubr.f32.gmra.mrb[0].mxu0 %v534
        %v651 = vpop.f32.mrb[0].mxu0
        %v652 = vadd.f32 %v524, %v651
        %v653 = vpop.f32.mrb[0].mxu0
        %654 = vmatprep.mubr.f32.mxu0 0.0
        %655 = vmatmul.mubr.f32.gmra.mrb[0].mxu0 %v537
        %v656 = vpop.f32.mrb[0].mxu0
        %v657 = vadd.f32 %v524, %v656
        %v658 = vpop.f32.mrb[0].mxu0
        %659 = vmatprep.mubr.f32.mxu0 0.0
        %660 = vmatmul.mubr.f32.gmra.mrb[0].mxu0 %v540
        %v661 = vpop.f32.mrb[0].mxu0
        %v662 = vadd.f32 %v524, %v661
        %v663 = vpop.f32.mrb[0].mxu0
        %664 = vmatprep.mubr.f32.mxu0 0.0
        %665 = vmatmul.mubr.f32.gmra.mrb[0].mxu0 %v543
        %v666 = vpop.f32.mrb[0].mxu0
        %v667 = vadd.f32 %v524, %v666
        %v668 = vpop.f32.mrb[0].mxu0
        %669 = vmatprep.mubr.f32.mxu0 0.0
        %670 = vmatmul.mubr.f32.gmra.mrb[0].mxu0 %v546
        %v671 = vpop.f32.mrb[0].mxu0
        %v672 = vadd.f32 %v524, %v671
        %v673 = vpop.f32.mrb[0].mxu0
        %674 = vmatprep.mubr.f32.mxu0 0.0
        %675 = vmatmul.mubr.f32.gmra.mrb[0].mxu0 %v549
        %v676 = vpop.f32.mrb[0].mxu0
        %v677 = vadd.f32 %v524, %v676
        %v678 = vpop.f32.mrb[0].mxu0
        %679 = vmatprep.mubr.f32.mxu0 0.0
        %680 = vmatmul.mubr.f32.gmra.mrb[0].mxu0 %v552
        %v681 = vpop.f32.mrb[0].mxu0
        %v682 = vadd.f32 %v524, %v681
        %v683 = vpop.f32.mrb[0].mxu0
        %684 = vmatprep.mubr.f32.mxu0 0.0
        %685 = vmatmul.mubr.f32.gmra.mrb[0].mxu0 %v555
        %v686 = vpop.f32.mrb[0].mxu0
        %v687 = vadd.f32 %v524, %v686
        %v688 = vpop.f32.mrb[0].mxu0
        %689 = vmatprep.mubr.f32.mxu0 0.0
        %690 = vmatmul.mubr.f32.gmra.mrb[0].mxu0 %v558
        %v691 = vpop.f32.mrb[0].mxu0
        %v692 = vadd.f32 %v524, %v691
        %v693 = vpop.f32.mrb[0].mxu0
        %694 = vmatprep.mubr.f32.mxu0 0.0
        %695 = vmatmul.mubr.f32.gmra.mrb[0].mxu0 %v561
        %v696 = vpop.f32.mrb[0].mxu0
        %v697 = vadd.f32 %v524, %v696
        %v698 = vpop.f32.mrb[0].mxu0
        %699 = vmatprep.mubr.f32.mxu0 0.0
        %700 = vmatmul.mubr.f32.gmra.mrb[0].mxu0 %v564
        %v701 = vpop.f32.mrb[0].mxu0
        %v702 = vadd.f32 %v524, %v701
        %v703 = vpop.f32.mrb[0].mxu0
        %704 = vmatprep.mubr.f32.mxu0 0.0
        %705 = vmatmul.mubr.f32.gmra.mrb[0].mxu0 %v567
        %v706 = vpop.f32.mrb[0].mxu0
        %v707 = vadd.f32 %v524, %v706
        %v708 = vpop.f32.mrb[0].mxu0
        %709 = vmatprep.mubr.f32.mxu0 0.0
        %710 = vmatmul.mubr.f32.gmra.mrb[0].mxu0 %v570
        %v711 = vpop.f32.mrb[0].mxu0
        %v712 = vadd.f32 %v524, %v711
        %v713 = vpop.f32.mrb[0].mxu0
        %714 = vmatprep.mubr.f32.mxu0 0.0
        %715 = vmatmul.mubr.f32.gmra.mrb[0].mxu0 %v573
        %v716 = vpop.f32.mrb[0].mxu0
        %v717 = vadd.f32 %v524, %v716
        %v718 = vpop.f32.mrb[0].mxu0
        %719 = vdwg.mxu0
        %v720 = vmax.f32 %v642, 0.0
        %v721 = vmax.f32 %v647, 0.0
        %v722 = vmax.f32 %v652, 0.0
        %v723 = vmax.f32 %v657, 0.0
        %v724 = vmax.f32 %v662, 0.0
        %v725 = vmax.f32 %v667, 0.0
        %v726 = vmax.f32 %v672, 0.0
        %v727 = vmax.f32 %v677, 0.0
        %v728 = vmax.f32 %v682, 0.0
        %v729 = vmax.f32 %v687, 0.0
        %v730 = vmax.f32 %v692, 0.0
        %v731 = vmax.f32 %v697, 0.0
        %v732 = vmax.f32 %v702, 0.0
        %v733 = vmax.f32 %v707, 0.0
        %v734 = vmax.f32 %v712, 0.0
        %v735 = vmax.f32 %v717, 0.0
        %v736 = vld [vmem:[%s5] sm:$0x1]
        %v737 = vld [vmem:[#allocation2] sm:$0x1]
        %739 = vset.pattern.permute.xlu0 0
        %740 = vperm.xlu0 %739, %v737
        %v741 = vpop.permute.xlu0 %740
        %v743 = vlaneseq
        %v744 = vshrl.u32 %v743, 7
        %v745 = vsub.s32 0, %v744
        %v746 = vrot.slane %v741, %v745
        %v748 = vsel %vm305, %v736, 0
        %v751 = vsel %vm305, %v720, 0
        %v754 = vsel %vm305, %v721, 0
        %v757 = vsel %vm305, %v722, 0
        %v760 = vsel %vm305, %v723, 0
        %v763 = vsel %vm305, %v724, 0
        %v766 = vsel %vm305, %v725, 0
        %v769 = vsel %vm305, %v726, 0
        %v772 = vsel %vm305, %v727, 0
        %v775 = vsel %vm305, %v728, 0
        %v778 = vsel %vm305, %v729, 0
        %v781 = vsel %vm305, %v730, 0
        %v784 = vsel %vm305, %v731, 0
        %v787 = vsel %vm305, %v732, 0
        %v790 = vsel %vm305, %v733, 0
        %v793 = vsel %vm305, %v734, 0
        %v796 = vsel %vm305, %v735, 0
        %798 = vmatprep.subr.mxu0 0.0
        %799 = vmatpush1.xpose.msra.mxu0 %v751
        %800 = vmatprep.subr.mxu0 0.0
        %801 = vmatpush1.xpose.msra.mxu0 %v754
        %802 = vmatprep.subr.mxu0 0.0
        %803 = vmatpush1.xpose.msra.mxu0 %v757
        %804 = vmatprep.subr.mxu0 0.0
        %805 = vmatpush1.xpose.msra.mxu0 %v760
        %806 = vmatprep.subr.mxu0 0.0
        %807 = vmatpush1.xpose.msra.mxu0 %v763
        %808 = vmatprep.subr.mxu0 0.0
        %809 = vmatpush1.xpose.msra.mxu0 %v766
        %810 = vmatprep.subr.mxu0 0.0
        %811 = vmatpush1.xpose.msra.mxu0 %v769
        %812 = vmatprep.subr.mxu0 0.0
        %813 = vmatpush1.xpose.msra.mxu0 %v772
        %814 = vmatprep.subr.mxu0 0.0
        %815 = vmatpush1.xpose.msra.mxu0 %v775
        %816 = vmatprep.subr.mxu0 0.0
        %817 = vmatpush1.xpose.msra.mxu0 %v778
        %818 = vmatprep.subr.mxu0 0.0
        %819 = vmatpush1.xpose.msra.mxu0 %v781
        %820 = vmatprep.subr.mxu0 0.0
        %821 = vmatpush1.xpose.msra.mxu0 %v784
        %822 = vmatprep.subr.mxu0 0.0
        %823 = vmatpush1.xpose.msra.mxu0 %v787
        %824 = vmatprep.subr.mxu0 0.0
        %825 = vmatpush1.xpose.msra.mxu0 %v790
        %826 = vmatprep.subr.mxu0 0.0
        %827 = vmatpush1.xpose.msra.mxu0 %v793
        %828 = vmatprep.subr.mxu0 0.0
        %829 = vmatpush1.xpose.msra.mxu0 %v796
        %830 = vmatprep.subr.mxu0 0.0
        %831 = vmatpush1.xpose.msra.mxu0 0.0
        %832 = vmatprep.subr.mxu0 0.0
        %833 = vmatpush1.xpose.msra.mxu0 0.0
        %834 = vmatprep.subr.mxu0 0.0
        %835 = vmatpush1.xpose.msra.mxu0 0.0
        %836 = vmatprep.subr.mxu0 0.0
        %837 = vmatpush1.xpose.msra.mxu0 0.0
        %838 = vmatprep.subr.mxu0 0.0
        %839 = vmatpush1.xpose.msra.mxu0 0.0
        %840 = vmatprep.subr.mxu0 0.0
        %841 = vmatpush1.xpose.msra.mxu0 0.0
        %842 = vmatprep.subr.mxu0 0.0
        %843 = vmatpush1.xpose.msra.mxu0 0.0
        %844 = vmatprep.subr.mxu0 0.0
        %845 = vmatpush1.xpose.msra.mxu0 0.0
        %846 = vmatprep.subr.mxu0 0.0
        %847 = vmatpush1.xpose.msra.mxu0 0.0
        %848 = vmatprep.subr.mxu0 0.0
        %849 = vmatpush1.xpose.msra.mxu0 0.0
        %850 = vmatprep.subr.mxu0 0.0
        %851 = vmatpush1.xpose.msra.mxu0 0.0
        %852 = vmatprep.subr.mxu0 0.0
        %853 = vmatpush1.xpose.msra.mxu0 0.0
        %854 = vmatprep.subr.mxu0 0.0
        %855 = vmatpush1.xpose.msra.mxu0 0.0
        %856 = vmatprep.subr.mxu0 0.0
        %857 = vmatpush1.xpose.msra.mxu0 0.0
        %858 = vmatprep.subr.mxu0 0.0
        %859 = vmatpush1.xpose.msra.mxu0 0.0
        %860 = vmatprep.subr.mxu0 0.0
        %861 = vmatpush1.xpose.msra.mxu0 0.0
        %862 = vmatprep.mubr.f32.mxu0 0.0
        %863 = vmatmul.mubr.f32.gmra.mrb[0].mxu0 %v748
        %v864 = vpop.f32.mrb[0].mxu0
        %v865 = vadd.f32 %v746, %v864
        %v866 = vpop.f32.mrb[0].mxu0
        %867 = vdwg.mxu0
        %868 = vst [vmem:[%s273] sm:$0x1] %v865
        %s869 = sand.u32 %s183, 1
        %s870 = scalar_lea.sflag [#allocation4], %s869
        %s871 = sand.u32 %s183, 1
        %s872 = scalar_lea.vmem [#allocation3], %s871
        // Predicated region
        $region49: #{tpu_custom_call.1} parent=47 // pred_check
          %p873 = pneg %p193
        $region50: #{tpu_custom_call.1} parent=47 // pred_check_branch
          %875 = sbr.rel (%p873) target = $region52
        $region51: #{tpu_custom_call.1} parent=47 // pred_region
          %s877 = ssub.s32 16, 16
          %878 = vsyncadd %s870, %s877
          %s879 = smul.addr %s23, 16
          %s880 = scalar_lea.hbm %s7, %s879
          %s882 = sshll.u32 %s872, 4
          %s883 = int_to_ptr.vmem [resolvable:$true] %s882
          %885 = dma.vmem_to_hbm [thread:$0]  %s883, 16, %s880, %s870
        $region52: #{tpu_custom_call.1} parent=47 // pred_fallthru
          _
      $region48: #{tpu_custom_call.1} parent=5 // pred_fallthru
        _
      %p886 = scmp.le.s32.totalorder 2, %s18
      // Predicated region
      $region53: #{tpu_custom_call.1} parent=5 // pred_check
        %p887 = pneg %p886
      $region54: #{tpu_custom_call.1} parent=5 // pred_check_branch
        %889 = sbr.rel (%p887) target = $region56
      $region55: #{tpu_custom_call.1} parent=5 // pred_region
        %s890 = ssub.s32 %s18, 2
        // Predicated region
        $region57: #{tpu_custom_call.1} parent=55 // pred_check
          %p891 = pneg %p199
        $region58: #{tpu_custom_call.1} parent=55 // pred_check_branch
          %893 = sbr.rel (%p891) target = $region60
        $region59: #{tpu_custom_call.1} parent=55 // pred_region
          %s894 = sand.u32 %s184, 1
          %s895 = scalar_lea.sflag [#allocation4], %s894
          %s896 = sand.u32 %s184, 1
          %s897 = scalar_lea.vmem [#allocation3], %s896
          %898 = dma.done %s895, 16
        $region60: #{tpu_custom_call.1} parent=55 // pred_fallthru
          _
      $region56: #{tpu_custom_call.1} parent=5 // pred_fallthru
        _
    $region6: #{tpu_custom_call.1} parent=1 // loop_footer
      %s22 = sadd.s32 1, %s18
    $region7: #{tpu_custom_call.1} parent=1 // loop_footer_branch
      %17 = sbr.rel target = $region3
    $region8: #{tpu_custom_call.1} parent=1 // loop_exit
      _
    %899 = vsyncpa [#allocation4], 1
    %s900 = scalar_lea.sflag [#allocation4], 1
    %901 = vsyncpa %s900, 1

</llo_original>
